<compile_context>
chip_gen: v6e
topology: v6e:2x2x1
jax: 0.10.0
libtpu: 0.0.40
codegen_flags: <defaults>
</compile_context>

<pallas_src>
import jax
import jax.numpy as jnp
from jax import lax
from jax.experimental import pallas as pl
from jax.experimental.pallas import tpu as pltpu

H = 64          # hidden size
NUM_LAYERS = 3


def _make_wavefront_kernel(T, Bp, unroll):
    """Kernel for static sequence length T and padded batch Bp."""
    H3 = NUM_LAYERS * H
    Tw = T + NUM_LAYERS - 1          # wavefront steps (layers staggered by 1)

    def kernel(x_ref,        # (Tw*Bp, 1)  time-major, batch-padded, zero tail for drain
               wb_ref,       # (H3, H3)    block weights: Whh_l diag, Wih_{l+1} super-diag
               b_ref,        # (1, H3)     fused (bih + bhh) per layer
               xrow_ref,     # (1, H3)     Wih0^T in cols 0:H, zeros elsewhere
               wfc_ref,      # (H, 1)
               bfc_ref,      # (1, 1)
               out_ref):     # (Bp, 1)

        def wave_step(s, S):
            off = s * Bp
            if not isinstance(off, int):
                off = pl.multiple_of(off, Bp)            # Bp is a multiple of 8
            x_s = x_ref[pl.ds(off, Bp), :]               # (Bp, 1); zeros for s >= T
            # One MXU matmul advances all three layers at once; the next layer's
            # input projection rides in the same dot, so no hidden-sequence slab
            # is ever materialized.
            # TODO(synk): hold wb in MXU weight-staging registers across the loop
            # (pltpu.matmul_push_rhs / matmul_acc_lhs / matmul_pop) to avoid
            # re-streaming the 192x192 RHS on every dependent step.
            pre = (jnp.dot(S, wb_ref[...], preferred_element_type=jnp.float32)
                   + b_ref[...] + x_s * xrow_ref[...])
            return jnp.tanh(pre)

        col = lax.broadcasted_iota(jnp.int32, (Bp, H3), 1)
        S = jnp.zeros((Bp, H3), jnp.float32)

        # Warm-up steps peeled so the steady loop needs no per-step masking:
        # layer l must still have a zero hidden state when it first runs (step l).
        S = jnp.where(col < H, wave_step(0, S), 0.0)          # only layer 0 live
        S = jnp.where(col < 2 * H, wave_step(1, S), 0.0)      # layers 0, 1 live

        # Steady state + drain: wavefront steps 2 .. T+1.
        S = lax.fori_loop(2, Tw, wave_step, S, unroll=unroll)

        h_top = S[:, 2 * H:3 * H]                             # layer-2 state at t = T-1
        out_ref[...] = (jnp.dot(h_top, wfc_ref[...],
                                preferred_element_type=jnp.float32)
                        + bfc_ref[...])

    return kernel


def init_params(key):
    """Deterministic init matching the PyTorch module's parameter shapes."""
    k = 1.0 / jnp.sqrt(jnp.float32(H))
    p = {}
    keys = jax.random.split(key, 4 * NUM_LAYERS + 2)
    ki = 0
    for l in range(NUM_LAYERS):
        in_dim = 1 if l == 0 else H
        p[f"wih{l}"] = jax.random.uniform(keys[ki], (H, in_dim), jnp.float32, -k, k); ki += 1
        p[f"whh{l}"] = jax.random.uniform(keys[ki], (H, H), jnp.float32, -k, k); ki += 1
        p[f"bih{l}"] = jax.random.uniform(keys[ki], (H,), jnp.float32, -k, k); ki += 1
        p[f"bhh{l}"] = jax.random.uniform(keys[ki], (H,), jnp.float32, -k, k); ki += 1
    p["wfc"] = jax.random.uniform(keys[ki], (1, H), jnp.float32, -k, k); ki += 1
    p["bfc"] = jax.random.uniform(keys[ki], (1,), jnp.float32, -k, k)
    return p


def stock_rnn_forward(x, p):
    """x: (B, T, 1) float32  ->  (B, 1) float32"""
    B, T, _ = x.shape
    Bp = ((B + 7) // 8) * 8                      # pad batch to a sublane multiple
    Tw = T + NUM_LAYERS - 1                      # wavefront steps
    H3 = NUM_LAYERS * H

    # Time-major, batch-padded, tail-padded (drain steps read x == 0) input column.
    # TODO(synk): for very long T, stream x per time chunk (lane-dense blocks) via a
    # grid axis instead of keeping the whole (Tw*Bp, 1) column resident in VMEM.
    x_tb = jnp.transpose(x[..., 0], (1, 0)).astype(jnp.float32)       # (T, B)
    x_tb = jnp.pad(x_tb, ((0, Tw - T), (0, Bp - B)))                  # (Tw, Bp)
    x_col = x_tb.reshape(Tw * Bp, 1)

    # Block weight matrix: Whh_l^T on the diagonal, Wih_{l+1}^T one block to the right.
    Wb = jnp.zeros((H3, H3), jnp.float32)
    for l in range(NUM_LAYERS):
        Wb = Wb.at[l * H:(l + 1) * H, l * H:(l + 1) * H].set(jnp.transpose(p[f"whh{l}"]))
        if l + 1 < NUM_LAYERS:
            Wb = Wb.at[l * H:(l + 1) * H, (l + 1) * H:(l + 2) * H].set(
                jnp.transpose(p[f"wih{l + 1}"]))

    b_all = jnp.concatenate(
        [p[f"bih{l}"] + p[f"bhh{l}"] for l in range(NUM_LAYERS)]).reshape(1, H3)
    xrow = jnp.concatenate(
        [p["wih0"][:, 0], jnp.zeros(((NUM_LAYERS - 1) * H,), jnp.float32)]).reshape(1, H3)

    wfc_t = jnp.transpose(p["wfc"])              # (H, 1)
    bfc = p["bfc"].reshape(1, 1)                 # (1, 1)

    unroll = True if Tw <= 34 else 4             # latency-bound loop: cap the unroll

    vmem = pl.BlockSpec(memory_space=pltpu.MemorySpace.VMEM)
    out = pl.pallas_call(
        _make_wavefront_kernel(T, Bp, unroll),
        out_shape=jax.ShapeDtypeStruct((Bp, 1), jnp.float32),
        in_specs=[vmem] * 6,
        out_specs=vmem,
    )(x_col, Wb, b_all, xrow, wfc_t, bfc)
    return out[:B]


def ref_forward(x, p):
    """Pure-JAX reference mirroring PyTorch nn.RNN(eval) + Linear semantics."""
    B, T, _ = x.shape
    inp = x.astype(jnp.float32)                   # (B, T, in_dim)
    for l in range(NUM_LAYERS):
        Wih, Whh = p[f"wih{l}"], p[f"whh{l}"]
        bih, bhh = p[f"bih{l}"], p[f"bhh{l}"]
        h = jnp.zeros((B, H), jnp.float32)
        outs = []
        for t in range(T):
            h = jnp.tanh(inp[:, t] @ Wih.T + bih + h @ Whh.T + bhh)
            outs.append(h)
        inp = jnp.stack(outs, axis=1)             # (B, T, H)
    return inp[:, -1] @ p["wfc"].T + p["bfc"]     # (B, 1)


if __name__ == "__main__":
    key = jax.random.PRNGKey(0)
    k_x, k_p, k_x2 = jax.random.split(key, 3)

    params = init_params(k_p)

    # Primary test: small shape implied by the module (batch=2, seq=8, input=1).
    B, T = 2, 8
    x = jax.random.normal(k_x, (B, T, 1), jnp.float32)
    out = jax.block_until_ready(stock_rnn_forward(x, params))
    ref = ref_forward(x, params)
    assert out.shape == (B, 1)
    assert jnp.allclose(out, ref, atol=1e-4, rtol=1e-4), (out, ref)

    # Secondary check: longer sequence + non-multiple-of-8 batch exercises the
    # non-fully-unrolled loop path, batch padding, and the wavefront drain steps.
    B2, T2 = 3, 40
    x2 = jax.random.normal(k_x2, (B2, T2, 1), jnp.float32)
    out2 = jax.block_until_ready(stock_rnn_forward(x2, params))
    ref2 = ref_forward(x2, params)
    assert out2.shape == (B2, 1)
    assert jnp.allclose(out2, ref2, atol=1e-3, rtol=1e-3), (out2, ref2)

    print("KERNEL_OK")
</pallas_src>

<mosaic_0001>
module attributes {stable_mosaic.version = 11 : i64} {
  func.func @kernel(%arg0: memref<80x1xf32, #tpu.memory_space<vmem>>, %arg1: memref<192x192xf32, #tpu.memory_space<vmem>>, %arg2: memref<1x192xf32, #tpu.memory_space<vmem>>, %arg3: memref<1x192xf32, #tpu.memory_space<vmem>>, %arg4: memref<64x1xf32, #tpu.memory_space<vmem>>, %arg5: memref<1x1xf32, #tpu.memory_space<vmem>>, %arg6: memref<8x1xf32, #tpu.memory_space<vmem>>) attributes {dimension_semantics = [], scalar_prefetch = 0 : i64, scratch_operands = 0 : i64, tpu.core_type = #tpu.core_type<tc>} {
    %0 = tpu.iota {dimensions = array<i32: 1>} : vector<8x192xi32>
    %cst = arith.constant 0.000000e+00 : f32
    %1 = vector.broadcast %cst : f32 to vector<8x192xf32>
    %c64_i32 = arith.constant 64 : i32
    %2 = vector.broadcast %c64_i32 : i32 to vector<8x192xi32>
    %3 = arith.cmpi slt, %0, %2 : vector<8x192xi32>
    %c0 = arith.constant 0 : index
    %c0_0 = arith.constant 0 : index
    %4 = vector.load %arg0[%c0, %c0_0] : memref<80x1xf32, #tpu.memory_space<vmem>>, vector<8x1xf32>
    %c0_1 = arith.constant 0 : index
    %c0_2 = arith.constant 0 : index
    %5 = vector.load %arg1[%c0_1, %c0_2] : memref<192x192xf32, #tpu.memory_space<vmem>>, vector<192x192xf32>
    %cst_3 = arith.constant dense<0.000000e+00> : vector<8x192xf32>
    %6 = tpu.matmul %1, %5, %cst_3 {dimension_numbers = #tpu.dot_dimension_numbers<[1], [0], [0], [1], [0, 0, 1, 1], [], []>} : vector<8x192xf32>, vector<192x192xf32>, vector<8x192xf32> -> vector<8x192xf32>
    %c0_4 = arith.constant 0 : index
    %c0_5 = arith.constant 0 : index
    %7 = vector.load %arg2[%c0_4, %c0_5] : memref<1x192xf32, #tpu.memory_space<vmem>>, vector<1x192xf32>
    %8 = vector.broadcast %7 : vector<1x192xf32> to vector<8x192xf32>
    %9 = arith.addf %6, %8 : vector<8x192xf32>
    %c0_6 = arith.constant 0 : index
    %c0_7 = arith.constant 0 : index
    %10 = vector.load %arg3[%c0_6, %c0_7] : memref<1x192xf32, #tpu.memory_space<vmem>>, vector<1x192xf32>
    %11 = vector.broadcast %4 : vector<8x1xf32> to vector<8x192xf32>
    %12 = vector.broadcast %10 : vector<1x192xf32> to vector<8x192xf32>
    %13 = arith.mulf %11, %12 : vector<8x192xf32>
    %14 = arith.addf %9, %13 : vector<8x192xf32>
    %15 = math.tanh %14 : vector<8x192xf32>
    %cst_8 = arith.constant 0.000000e+00 : f32
    %16 = vector.broadcast %cst_8 : f32 to vector<8x192xf32>
    %17 = arith.select %3, %15, %16 : vector<8x192xi1>, vector<8x192xf32>
    %c128_i32 = arith.constant 128 : i32
    %18 = vector.broadcast %c128_i32 : i32 to vector<8x192xi32>
    %19 = arith.cmpi slt, %0, %18 : vector<8x192xi32>
    %c8 = arith.constant 8 : index
    %c0_9 = arith.constant 0 : index
    %20 = vector.load %arg0[%c8, %c0_9] : memref<80x1xf32, #tpu.memory_space<vmem>>, vector<8x1xf32>
    %c0_10 = arith.constant 0 : index
    %c0_11 = arith.constant 0 : index
    %21 = vector.load %arg1[%c0_10, %c0_11] : memref<192x192xf32, #tpu.memory_space<vmem>>, vector<192x192xf32>
    %cst_12 = arith.constant dense<0.000000e+00> : vector<8x192xf32>
    %22 = tpu.matmul %17, %21, %cst_12 {dimension_numbers = #tpu.dot_dimension_numbers<[1], [0], [0], [1], [0, 0, 1, 1], [], []>} : vector<8x192xf32>, vector<192x192xf32>, vector<8x192xf32> -> vector<8x192xf32>
    %c0_13 = arith.constant 0 : index
    %c0_14 = arith.constant 0 : index
    %23 = vector.load %arg2[%c0_13, %c0_14] : memref<1x192xf32, #tpu.memory_space<vmem>>, vector<1x192xf32>
    %24 = vector.broadcast %23 : vector<1x192xf32> to vector<8x192xf32>
    %25 = arith.addf %22, %24 : vector<8x192xf32>
    %c0_15 = arith.constant 0 : index
    %c0_16 = arith.constant 0 : index
    %26 = vector.load %arg3[%c0_15, %c0_16] : memref<1x192xf32, #tpu.memory_space<vmem>>, vector<1x192xf32>
    %27 = vector.broadcast %20 : vector<8x1xf32> to vector<8x192xf32>
    %28 = vector.broadcast %26 : vector<1x192xf32> to vector<8x192xf32>
    %29 = arith.mulf %27, %28 : vector<8x192xf32>
    %30 = arith.addf %25, %29 : vector<8x192xf32>
    %31 = math.tanh %30 : vector<8x192xf32>
    %cst_17 = arith.constant 0.000000e+00 : f32
    %32 = vector.broadcast %cst_17 : f32 to vector<8x192xf32>
    %33 = arith.select %19, %31, %32 : vector<8x192xi1>, vector<8x192xf32>
    %c2_i32 = arith.constant 2 : i32
    %c8_i32 = arith.constant 8 : i32
    %34 = arith.muli %c2_i32, %c8_i32 : i32
    %35 = tpu.assume_multiple %34, 8 : i32
    %36 = arith.index_cast %35 : i32 to index
    %c0_18 = arith.constant 0 : index
    %37 = vector.load %arg0[%36, %c0_18] : memref<80x1xf32, #tpu.memory_space<vmem>>, vector<8x1xf32>
    %c0_19 = arith.constant 0 : index
    %c0_20 = arith.constant 0 : index
    %38 = vector.load %arg1[%c0_19, %c0_20] : memref<192x192xf32, #tpu.memory_space<vmem>>, vector<192x192xf32>
    %cst_21 = arith.constant dense<0.000000e+00> : vector<8x192xf32>
    %39 = tpu.matmul %33, %38, %cst_21 {dimension_numbers = #tpu.dot_dimension_numbers<[1], [0], [0], [1], [0, 0, 1, 1], [], []>} : vector<8x192xf32>, vector<192x192xf32>, vector<8x192xf32> -> vector<8x192xf32>
    %c0_22 = arith.constant 0 : index
    %c0_23 = arith.constant 0 : index
    %40 = vector.load %arg2[%c0_22, %c0_23] : memref<1x192xf32, #tpu.memory_space<vmem>>, vector<1x192xf32>
    %41 = vector.broadcast %40 : vector<1x192xf32> to vector<8x192xf32>
    %42 = arith.addf %39, %41 : vector<8x192xf32>
    %c0_24 = arith.constant 0 : index
    %c0_25 = arith.constant 0 : index
    %43 = vector.load %arg3[%c0_24, %c0_25] : memref<1x192xf32, #tpu.memory_space<vmem>>, vector<1x192xf32>
    %44 = vector.broadcast %37 : vector<8x1xf32> to vector<8x192xf32>
    %45 = vector.broadcast %43 : vector<1x192xf32> to vector<8x192xf32>
    %46 = arith.mulf %44, %45 : vector<8x192xf32>
    %47 = arith.addf %42, %46 : vector<8x192xf32>
    %48 = math.tanh %47 : vector<8x192xf32>
    %c3_i32 = arith.constant 3 : i32
    %c8_i32_26 = arith.constant 8 : i32
    %49 = arith.muli %c3_i32, %c8_i32_26 : i32
    %50 = tpu.assume_multiple %49, 8 : i32
    %51 = arith.index_cast %50 : i32 to index
    %c0_27 = arith.constant 0 : index
    %52 = vector.load %arg0[%51, %c0_27] : memref<80x1xf32, #tpu.memory_space<vmem>>, vector<8x1xf32>
    %c0_28 = arith.constant 0 : index
    %c0_29 = arith.constant 0 : index
    %53 = vector.load %arg1[%c0_28, %c0_29] : memref<192x192xf32, #tpu.memory_space<vmem>>, vector<192x192xf32>
    %cst_30 = arith.constant dense<0.000000e+00> : vector<8x192xf32>
    %54 = tpu.matmul %48, %53, %cst_30 {dimension_numbers = #tpu.dot_dimension_numbers<[1], [0], [0], [1], [0, 0, 1, 1], [], []>} : vector<8x192xf32>, vector<192x192xf32>, vector<8x192xf32> -> vector<8x192xf32>
    %c0_31 = arith.constant 0 : index
    %c0_32 = arith.constant 0 : index
    %55 = vector.load %arg2[%c0_31, %c0_32] : memref<1x192xf32, #tpu.memory_space<vmem>>, vector<1x192xf32>
    %56 = vector.broadcast %55 : vector<1x192xf32> to vector<8x192xf32>
    %57 = arith.addf %54, %56 : vector<8x192xf32>
    %c0_33 = arith.constant 0 : index
    %c0_34 = arith.constant 0 : index
    %58 = vector.load %arg3[%c0_33, %c0_34] : memref<1x192xf32, #tpu.memory_space<vmem>>, vector<1x192xf32>
    %59 = vector.broadcast %52 : vector<8x1xf32> to vector<8x192xf32>
    %60 = vector.broadcast %58 : vector<1x192xf32> to vector<8x192xf32>
    %61 = arith.mulf %59, %60 : vector<8x192xf32>
    %62 = arith.addf %57, %61 : vector<8x192xf32>
    %63 = math.tanh %62 : vector<8x192xf32>
    %c4_i32 = arith.constant 4 : i32
    %c8_i32_35 = arith.constant 8 : i32
    %64 = arith.muli %c4_i32, %c8_i32_35 : i32
    %65 = tpu.assume_multiple %64, 8 : i32
    %66 = arith.index_cast %65 : i32 to index
    %c0_36 = arith.constant 0 : index
    %67 = vector.load %arg0[%66, %c0_36] : memref<80x1xf32, #tpu.memory_space<vmem>>, vector<8x1xf32>
    %c0_37 = arith.constant 0 : index
    %c0_38 = arith.constant 0 : index
    %68 = vector.load %arg1[%c0_37, %c0_38] : memref<192x192xf32, #tpu.memory_space<vmem>>, vector<192x192xf32>
    %cst_39 = arith.constant dense<0.000000e+00> : vector<8x192xf32>
    %69 = tpu.matmul %63, %68, %cst_39 {dimension_numbers = #tpu.dot_dimension_numbers<[1], [0], [0], [1], [0, 0, 1, 1], [], []>} : vector<8x192xf32>, vector<192x192xf32>, vector<8x192xf32> -> vector<8x192xf32>
    %c0_40 = arith.constant 0 : index
    %c0_41 = arith.constant 0 : index
    %70 = vector.load %arg2[%c0_40, %c0_41] : memref<1x192xf32, #tpu.memory_space<vmem>>, vector<1x192xf32>
    %71 = vector.broadcast %70 : vector<1x192xf32> to vector<8x192xf32>
    %72 = arith.addf %69, %71 : vector<8x192xf32>
    %c0_42 = arith.constant 0 : index
    %c0_43 = arith.constant 0 : index
    %73 = vector.load %arg3[%c0_42, %c0_43] : memref<1x192xf32, #tpu.memory_space<vmem>>, vector<1x192xf32>
    %74 = vector.broadcast %67 : vector<8x1xf32> to vector<8x192xf32>
    %75 = vector.broadcast %73 : vector<1x192xf32> to vector<8x192xf32>
    %76 = arith.mulf %74, %75 : vector<8x192xf32>
    %77 = arith.addf %72, %76 : vector<8x192xf32>
    %78 = math.tanh %77 : vector<8x192xf32>
    %c5_i32 = arith.constant 5 : i32
    %c8_i32_44 = arith.constant 8 : i32
    %79 = arith.muli %c5_i32, %c8_i32_44 : i32
    %80 = tpu.assume_multiple %79, 8 : i32
    %81 = arith.index_cast %80 : i32 to index
    %c0_45 = arith.constant 0 : index
    %82 = vector.load %arg0[%81, %c0_45] : memref<80x1xf32, #tpu.memory_space<vmem>>, vector<8x1xf32>
    %c0_46 = arith.constant 0 : index
    %c0_47 = arith.constant 0 : index
    %83 = vector.load %arg1[%c0_46, %c0_47] : memref<192x192xf32, #tpu.memory_space<vmem>>, vector<192x192xf32>
    %cst_48 = arith.constant dense<0.000000e+00> : vector<8x192xf32>
    %84 = tpu.matmul %78, %83, %cst_48 {dimension_numbers = #tpu.dot_dimension_numbers<[1], [0], [0], [1], [0, 0, 1, 1], [], []>} : vector<8x192xf32>, vector<192x192xf32>, vector<8x192xf32> -> vector<8x192xf32>
    %c0_49 = arith.constant 0 : index
    %c0_50 = arith.constant 0 : index
    %85 = vector.load %arg2[%c0_49, %c0_50] : memref<1x192xf32, #tpu.memory_space<vmem>>, vector<1x192xf32>
    %86 = vector.broadcast %85 : vector<1x192xf32> to vector<8x192xf32>
    %87 = arith.addf %84, %86 : vector<8x192xf32>
    %c0_51 = arith.constant 0 : index
    %c0_52 = arith.constant 0 : index
    %88 = vector.load %arg3[%c0_51, %c0_52] : memref<1x192xf32, #tpu.memory_space<vmem>>, vector<1x192xf32>
    %89 = vector.broadcast %82 : vector<8x1xf32> to vector<8x192xf32>
    %90 = vector.broadcast %88 : vector<1x192xf32> to vector<8x192xf32>
    %91 = arith.mulf %89, %90 : vector<8x192xf32>
    %92 = arith.addf %87, %91 : vector<8x192xf32>
    %93 = math.tanh %92 : vector<8x192xf32>
    %c6_i32 = arith.constant 6 : i32
    %c8_i32_53 = arith.constant 8 : i32
    %94 = arith.muli %c6_i32, %c8_i32_53 : i32
    %95 = tpu.assume_multiple %94, 8 : i32
    %96 = arith.index_cast %95 : i32 to index
    %c0_54 = arith.constant 0 : index
    %97 = vector.load %arg0[%96, %c0_54] : memref<80x1xf32, #tpu.memory_space<vmem>>, vector<8x1xf32>
    %c0_55 = arith.constant 0 : index
    %c0_56 = arith.constant 0 : index
    %98 = vector.load %arg1[%c0_55, %c0_56] : memref<192x192xf32, #tpu.memory_space<vmem>>, vector<192x192xf32>
    %cst_57 = arith.constant dense<0.000000e+00> : vector<8x192xf32>
    %99 = tpu.matmul %93, %98, %cst_57 {dimension_numbers = #tpu.dot_dimension_numbers<[1], [0], [0], [1], [0, 0, 1, 1], [], []>} : vector<8x192xf32>, vector<192x192xf32>, vector<8x192xf32> -> vector<8x192xf32>
    %c0_58 = arith.constant 0 : index
    %c0_59 = arith.constant 0 : index
    %100 = vector.load %arg2[%c0_58, %c0_59] : memref<1x192xf32, #tpu.memory_space<vmem>>, vector<1x192xf32>
    %101 = vector.broadcast %100 : vector<1x192xf32> to vector<8x192xf32>
    %102 = arith.addf %99, %101 : vector<8x192xf32>
    %c0_60 = arith.constant 0 : index
    %c0_61 = arith.constant 0 : index
    %103 = vector.load %arg3[%c0_60, %c0_61] : memref<1x192xf32, #tpu.memory_space<vmem>>, vector<1x192xf32>
    %104 = vector.broadcast %97 : vector<8x1xf32> to vector<8x192xf32>
    %105 = vector.broadcast %103 : vector<1x192xf32> to vector<8x192xf32>
    %106 = arith.mulf %104, %105 : vector<8x192xf32>
    %107 = arith.addf %102, %106 : vector<8x192xf32>
    %108 = math.tanh %107 : vector<8x192xf32>
    %c7_i32 = arith.constant 7 : i32
    %c8_i32_62 = arith.constant 8 : i32
    %109 = arith.muli %c7_i32, %c8_i32_62 : i32
    %110 = tpu.assume_multiple %109, 8 : i32
    %111 = arith.index_cast %110 : i32 to index
    %c0_63 = arith.constant 0 : index
    %112 = vector.load %arg0[%111, %c0_63] : memref<80x1xf32, #tpu.memory_space<vmem>>, vector<8x1xf32>
    %c0_64 = arith.constant 0 : index
    %c0_65 = arith.constant 0 : index
    %113 = vector.load %arg1[%c0_64, %c0_65] : memref<192x192xf32, #tpu.memory_space<vmem>>, vector<192x192xf32>
    %cst_66 = arith.constant dense<0.000000e+00> : vector<8x192xf32>
    %114 = tpu.matmul %108, %113, %cst_66 {dimension_numbers = #tpu.dot_dimension_numbers<[1], [0], [0], [1], [0, 0, 1, 1], [], []>} : vector<8x192xf32>, vector<192x192xf32>, vector<8x192xf32> -> vector<8x192xf32>
    %c0_67 = arith.constant 0 : index
    %c0_68 = arith.constant 0 : index
    %115 = vector.load %arg2[%c0_67, %c0_68] : memref<1x192xf32, #tpu.memory_space<vmem>>, vector<1x192xf32>
    %116 = vector.broadcast %115 : vector<1x192xf32> to vector<8x192xf32>
    %117 = arith.addf %114, %116 : vector<8x192xf32>
    %c0_69 = arith.constant 0 : index
    %c0_70 = arith.constant 0 : index
    %118 = vector.load %arg3[%c0_69, %c0_70] : memref<1x192xf32, #tpu.memory_space<vmem>>, vector<1x192xf32>
    %119 = vector.broadcast %112 : vector<8x1xf32> to vector<8x192xf32>
    %120 = vector.broadcast %118 : vector<1x192xf32> to vector<8x192xf32>
    %121 = arith.mulf %119, %120 : vector<8x192xf32>
    %122 = arith.addf %117, %121 : vector<8x192xf32>
    %123 = math.tanh %122 : vector<8x192xf32>
    %c8_i32_71 = arith.constant 8 : i32
    %c8_i32_72 = arith.constant 8 : i32
    %124 = arith.muli %c8_i32_71, %c8_i32_72 : i32
    %125 = tpu.assume_multiple %124, 8 : i32
    %126 = arith.index_cast %125 : i32 to index
    %c0_73 = arith.constant 0 : index
    %127 = vector.load %arg0[%126, %c0_73] : memref<80x1xf32, #tpu.memory_space<vmem>>, vector<8x1xf32>
    %c0_74 = arith.constant 0 : index
    %c0_75 = arith.constant 0 : index
    %128 = vector.load %arg1[%c0_74, %c0_75] : memref<192x192xf32, #tpu.memory_space<vmem>>, vector<192x192xf32>
    %cst_76 = arith.constant dense<0.000000e+00> : vector<8x192xf32>
    %129 = tpu.matmul %123, %128, %cst_76 {dimension_numbers = #tpu.dot_dimension_numbers<[1], [0], [0], [1], [0, 0, 1, 1], [], []>} : vector<8x192xf32>, vector<192x192xf32>, vector<8x192xf32> -> vector<8x192xf32>
    %c0_77 = arith.constant 0 : index
    %c0_78 = arith.constant 0 : index
    %130 = vector.load %arg2[%c0_77, %c0_78] : memref<1x192xf32, #tpu.memory_space<vmem>>, vector<1x192xf32>
    %131 = vector.broadcast %130 : vector<1x192xf32> to vector<8x192xf32>
    %132 = arith.addf %129, %131 : vector<8x192xf32>
    %c0_79 = arith.constant 0 : index
    %c0_80 = arith.constant 0 : index
    %133 = vector.load %arg3[%c0_79, %c0_80] : memref<1x192xf32, #tpu.memory_space<vmem>>, vector<1x192xf32>
    %134 = vector.broadcast %127 : vector<8x1xf32> to vector<8x192xf32>
    %135 = vector.broadcast %133 : vector<1x192xf32> to vector<8x192xf32>
    %136 = arith.mulf %134, %135 : vector<8x192xf32>
    %137 = arith.addf %132, %136 : vector<8x192xf32>
    %138 = math.tanh %137 : vector<8x192xf32>
    %c9_i32 = arith.constant 9 : i32
    %c8_i32_81 = arith.constant 8 : i32
    %139 = arith.muli %c9_i32, %c8_i32_81 : i32
    %140 = tpu.assume_multiple %139, 8 : i32
    %141 = arith.index_cast %140 : i32 to index
    %c0_82 = arith.constant 0 : index
    %142 = vector.load %arg0[%141, %c0_82] : memref<80x1xf32, #tpu.memory_space<vmem>>, vector<8x1xf32>
    %c0_83 = arith.constant 0 : index
    %c0_84 = arith.constant 0 : index
    %143 = vector.load %arg1[%c0_83, %c0_84] : memref<192x192xf32, #tpu.memory_space<vmem>>, vector<192x192xf32>
    %cst_85 = arith.constant dense<0.000000e+00> : vector<8x192xf32>
    %144 = tpu.matmul %138, %143, %cst_85 {dimension_numbers = #tpu.dot_dimension_numbers<[1], [0], [0], [1], [0, 0, 1, 1], [], []>} : vector<8x192xf32>, vector<192x192xf32>, vector<8x192xf32> -> vector<8x192xf32>
    %c0_86 = arith.constant 0 : index
    %c0_87 = arith.constant 0 : index
    %145 = vector.load %arg2[%c0_86, %c0_87] : memref<1x192xf32, #tpu.memory_space<vmem>>, vector<1x192xf32>
    %146 = vector.broadcast %145 : vector<1x192xf32> to vector<8x192xf32>
    %147 = arith.addf %144, %146 : vector<8x192xf32>
    %c0_88 = arith.constant 0 : index
    %c0_89 = arith.constant 0 : index
    %148 = vector.load %arg3[%c0_88, %c0_89] : memref<1x192xf32, #tpu.memory_space<vmem>>, vector<1x192xf32>
    %149 = vector.broadcast %142 : vector<8x1xf32> to vector<8x192xf32>
    %150 = vector.broadcast %148 : vector<1x192xf32> to vector<8x192xf32>
    %151 = arith.mulf %149, %150 : vector<8x192xf32>
    %152 = arith.addf %147, %151 : vector<8x192xf32>
    %153 = math.tanh %152 : vector<8x192xf32>
    %c8_i32_90 = arith.constant 8 : i32
    %154 = vector.extract_strided_slice %153 {offsets = [0, 128], sizes = [8, 64], strides = [1, 1]} : vector<8x192xf32> to vector<8x64xf32>
    %c0_91 = arith.constant 0 : index
    %c0_92 = arith.constant 0 : index
    %155 = vector.load %arg4[%c0_91, %c0_92] : memref<64x1xf32, #tpu.memory_space<vmem>>, vector<64x1xf32>
    %cst_93 = arith.constant dense<0.000000e+00> : vector<8x1xf32>
    %156 = tpu.matmul %154, %155, %cst_93 {dimension_numbers = #tpu.dot_dimension_numbers<[1], [0], [0], [1], [0, 0, 1, 1], [], []>} : vector<8x64xf32>, vector<64x1xf32>, vector<8x1xf32> -> vector<8x1xf32>
    %c0_94 = arith.constant 0 : index
    %c0_95 = arith.constant 0 : index
    %157 = vector.load %arg5[%c0_94, %c0_95] : memref<1x1xf32, #tpu.memory_space<vmem>>, vector<1x1xf32>
    %158 = vector.broadcast %157 : vector<1x1xf32> to vector<8x1xf32>
    %159 = arith.addf %156, %158 : vector<8x1xf32>
    %c0_96 = arith.constant 0 : index
    %c0_97 = arith.constant 0 : index
    %160 = vector.load %arg6[%c0_96, %c0_97] : memref<8x1xf32, #tpu.memory_space<vmem>>, vector<8x1xf32>
    tpu.vector_store %arg6[%c0_96, %c0_97], %159 {strides = array<i32>} : memref<8x1xf32, #tpu.memory_space<vmem>>, vector<8x1xf32>,
    return
  }
}

</mosaic_0001>

<llo_original>
// kernel: tpu_custom_call.1
$region0: #{tpu_custom_call.1}
  #allocation0 [shape = 'u32[]', space=smem, size = 0x4, offset = 0x4, fixed_abs, tag = 'smem constant byte address 0x4 - core index']
  #allocation1 [shape = 'u32[144,128]{1,0:T(1,128)}', space=vmem, size = 0x12000, scoped, tag = 'internal scratch']
  #allocation2 [shape = 'f32[1,1]{1,0:T(1,128)S(1)}', space=vmem, size = 0x200, scoped, tag = 'scoped memory for tpu_custom_call.1']
  %s0 = inlined_call_operand.vmem [shape: f32[80,1], index: 0, kind: input, shape index: {}]
  %s1 = inlined_call_operand.hbm [shape: f32[192,192], index: 1, kind: input, shape index: {}]
  %s2 = inlined_call_operand.vmem [shape: f32[1,192], index: 2, kind: input, shape index: {}]
  %s3 = inlined_call_operand.vmem [shape: f32[1,192], index: 3, kind: input, shape index: {}]
  %s4 = inlined_call_operand.vmem [shape: f32[64,1], index: 4, kind: input, shape index: {}]
  %s5 = inlined_call_operand.<no memory space> [shape: f32[1,1], index: 5, kind: input, shape index: {}]
  %s6 = inlined_call_operand.vmem [shape: f32[8,1], index: 6, kind: output, shape index: {}]
  %s7 = sld [smem:[#allocation0]]
  $region38: #{tpu_custom_call.1} parent=0
    _
  %s9 = ssub.s32 1, %s7
  %s10 = scalar_select 0, %s9, %s7
  %v11 = vstv %s5
  %12 = vst [vmem:[#allocation2] sm:$0x1] %v11
  $region1: #{tpu_custom_call.1} parent=0
    #allocation3 [shape = 'u8[196608]{0}', space=vmem, size = 0x30000, scoped, tag = 'input window, operand 1, single buffered']
    #allocation4 [shape = 's32[1]{0}', space=sflag, size = 0x4, scoped, tag = 'scoped memory for tpu_custom_call.1']
    %13 = vsyncpa [#allocation4], 0
    // Predicated region
    $region2: #{tpu_custom_call.1} parent=1 // pred_check
      _
    $region3: #{tpu_custom_call.1} parent=1 // pred_check_branch
      %15 = sbr.rel (0) target = $region5
    $region4: #{tpu_custom_call.1} parent=1 // pred_region
      _
    $region5: #{tpu_custom_call.1} parent=1 // pred_fallthru
      _
    // Predicated region
    $region6: #{tpu_custom_call.1} parent=1 // pred_check
      _
    $region7: #{tpu_custom_call.1} parent=1 // pred_check_branch
      %17 = sbr.rel (0) target = $region9
    $region8: #{tpu_custom_call.1} parent=1 // pred_region
      %s19 = ssub.s32 6144, 6144
      %20 = vsyncadd [#allocation4], %s19
      %s21 = sshll.u32 [#allocation3], 4
      %s22 = int_to_ptr.vmem [resolvable:$true] %s21
      %27 = dma.hbm_to_vmem [thread:$0]  %s1, 6144, %s22, [#allocation4], 256, 256, 16
    $region9: #{tpu_custom_call.1} parent=1 // pred_fallthru
      _
    // Predicated region
    $region10: #{tpu_custom_call.1} parent=1 // pred_check
      _
    $region11: #{tpu_custom_call.1} parent=1 // pred_check_branch
      %29 = sbr.rel (0) target = $region13
    $region12: #{tpu_custom_call.1} parent=1 // pred_region
      _
    $region13: #{tpu_custom_call.1} parent=1 // pred_fallthru
      _
    // Predicated region
    $region14: #{tpu_custom_call.1} parent=1 // pred_check
      _
    $region15: #{tpu_custom_call.1} parent=1 // pred_check_branch
      %31 = sbr.rel (0) target = $region17
    $region16: #{tpu_custom_call.1} parent=1 // pred_region
      _
    $region17: #{tpu_custom_call.1} parent=1 // pred_fallthru
      _
    // Predicated region
    $region18: #{tpu_custom_call.1} parent=1 // pred_check
      _
    $region19: #{tpu_custom_call.1} parent=1 // pred_check_branch
      %33 = sbr.rel (0) target = $region21
    $region20: #{tpu_custom_call.1} parent=1 // pred_region
      _
    $region21: #{tpu_custom_call.1} parent=1 // pred_fallthru
      _
    // Predicated region
    $region22: #{tpu_custom_call.1} parent=1 // pred_check
      _
    $region23: #{tpu_custom_call.1} parent=1 // pred_check_branch
      %35 = sbr.rel (0) target = $region25
    $region24: #{tpu_custom_call.1} parent=1 // pred_region
      _
    $region25: #{tpu_custom_call.1} parent=1 // pred_fallthru
      _
    // Predicated region
    $region26: #{tpu_custom_call.1} parent=1 // pred_check
      _
    $region27: #{tpu_custom_call.1} parent=1 // pred_check_branch
      %37 = sbr.rel (0) target = $region29
    $region28: #{tpu_custom_call.1} parent=1 // pred_region
      %38 = dma.done [#allocation4], 6144
    $region29: #{tpu_custom_call.1} parent=1 // pred_fallthru
      _
    %v39 = vlaneseq
    %v40 = vand.u32 %v39, 127
    %v41 = vadd.s32 %v40, 128
    %vm42 = vcmp.lt.s32.totalorder %v40, 64
    %vm43 = vcmp.lt.s32.totalorder %v41, 64
    %v44 = vld [vmem:[%s0] sm:$0xff]
    %v45 = vld [vmem:[#allocation3] sm:$0xff]
    %v46 = vld [vmem:[#allocation3 + $0x8] sm:$0xff]
    %v47 = vld [vmem:[#allocation3 + $0x10] sm:$0xff]
    %v48 = vld [vmem:[#allocation3 + $0x18] sm:$0xff]
    %v49 = vld [vmem:[#allocation3 + $0x20] sm:$0xff]
    %v50 = vld [vmem:[#allocation3 + $0x28] sm:$0xff]
    %v51 = vld [vmem:[#allocation3 + $0x30] sm:$0xff]
    %v52 = vld [vmem:[#allocation3 + $0x38] sm:$0xff]
    %v53 = vld [vmem:[#allocation3 + $0x40] sm:$0xff]
    %v54 = vld [vmem:[#allocation3 + $0x48] sm:$0xff]
    %v55 = vld [vmem:[#allocation3 + $0x50] sm:$0xff]
    %v56 = vld [vmem:[#allocation3 + $0x58] sm:$0xff]
    %v57 = vld [vmem:[#allocation3 + $0x60] sm:$0xff]
    %v58 = vld [vmem:[#allocation3 + $0x68] sm:$0xff]
    %v59 = vld [vmem:[#allocation3 + $0x70] sm:$0xff]
    %v60 = vld [vmem:[#allocation3 + $0x78] sm:$0xff]
    %v61 = vld [vmem:[#allocation3 + $0x80] sm:$0xff]
    %v62 = vld [vmem:[#allocation3 + $0x88] sm:$0xff]
    %v63 = vld [vmem:[#allocation3 + $0x90] sm:$0xff]
    %v64 = vld [vmem:[#allocation3 + $0x98] sm:$0xff]
    %v65 = vld [vmem:[#allocation3 + $0xa0] sm:$0xff]
    %v66 = vld [vmem:[#allocation3 + $0xa8] sm:$0xff]
    %v67 = vld [vmem:[#allocation3 + $0xb0] sm:$0xff]
    %v68 = vld [vmem:[#allocation3 + $0xb8] sm:$0xff]
    %v69 = vld [vmem:[#allocation3 + $0xc0] sm:$0xff]
    %v70 = vld [vmem:[#allocation3 + $0xc8] sm:$0xff]
    %v71 = vld [vmem:[#allocation3 + $0xd0] sm:$0xff]
    %v72 = vld [vmem:[#allocation3 + $0xd8] sm:$0xff]
    %v73 = vld [vmem:[#allocation3 + $0xe0] sm:$0xff]
    %v74 = vld [vmem:[#allocation3 + $0xe8] sm:$0xff]
    %v75 = vld [vmem:[#allocation3 + $0xf0] sm:$0xff]
    %v76 = vld [vmem:[#allocation3 + $0xf8] sm:$0xff]
    %v77 = vld [vmem:[#allocation3 + $0x100] sm:$0xff]
    %v78 = vld [vmem:[#allocation3 + $0x108] sm:$0xff]
    %v79 = vld [vmem:[#allocation3 + $0x110] sm:$0xff]
    %v80 = vld [vmem:[#allocation3 + $0x118] sm:$0xff]
    %v81 = vld [vmem:[#allocation3 + $0x120] sm:$0xff]
    %v82 = vld [vmem:[#allocation3 + $0x128] sm:$0xff]
    %v83 = vld [vmem:[#allocation3 + $0x130] sm:$0xff]
    %v84 = vld [vmem:[#allocation3 + $0x138] sm:$0xff]
    %v85 = vld [vmem:[#allocation3 + $0x140] sm:$0xff]
    %v86 = vld [vmem:[#allocation3 + $0x148] sm:$0xff]
    %v87 = vld [vmem:[#allocation3 + $0x150] sm:$0xff]
    %v88 = vld [vmem:[#allocation3 + $0x158] sm:$0xff]
    %v89 = vld [vmem:[#allocation3 + $0x160] sm:$0xff]
    %v90 = vld [vmem:[#allocation3 + $0x168] sm:$0xff]
    %v91 = vld [vmem:[#allocation3 + $0x170] sm:$0xff]
    %v92 = vld [vmem:[#allocation3 + $0x178] sm:$0xff]
    %v93 = vld [vmem:[%s2] sm:$0x3]
    %v95 = vlaneseq
    %v96 = vshrl.u32 %v95, 7
    %v97 = vsub.s32 0, %v96
    %v98 = vrot.slane %v93, %v97
    %v99 = vlaneseq
    %v100 = vshrl.u32 %v99, 7
    %v101 = vsub.s32 1, %v100
    %v102 = vrot.slane %v93, %v101
    %vm105 = vcmask 523264
    %v107 = vsel %vm105, 0.0, 0
    %109 = vmatprep.subr.mxu0 %v76
    %110 = vmatpush1.msra.mxu0 %v75
    %111 = vmatprep.subr.mxu0 %v74
    %112 = vmatpush1.msra.mxu0 %v73
    %113 = vmatprep.subr.mxu0 %v72
    %114 = vmatpush1.msra.mxu0 %v71
    %115 = vmatprep.subr.mxu0 %v70
    %116 = vmatpush1.msra.mxu0 %v69
    %117 = vmatprep.subr.mxu0 %v68
    %118 = vmatpush1.msra.mxu0 %v67
    %119 = vmatprep.subr.mxu0 %v66
    %120 = vmatpush1.msra.mxu0 %v65
    %121 = vmatprep.subr.mxu0 %v64
    %122 = vmatpush1.msra.mxu0 %v63
    %123 = vmatprep.subr.mxu0 %v62
    %124 = vmatpush1.msra.mxu0 %v61
    %125 = vmatprep.subr.mxu0 %v60
    %126 = vmatpush1.msra.mxu0 %v59
    %127 = vmatprep.subr.mxu0 %v58
    %128 = vmatpush1.msra.mxu0 %v57
    %129 = vmatprep.subr.mxu0 %v56
    %130 = vmatpush1.msra.mxu0 %v55
    %131 = vmatprep.subr.mxu0 %v54
    %132 = vmatpush1.msra.mxu0 %v53
    %133 = vmatprep.subr.mxu0 %v52
    %134 = vmatpush1.msra.mxu0 %v51
    %135 = vmatprep.subr.mxu0 %v50
    %136 = vmatpush1.msra.mxu0 %v49
    %137 = vmatprep.subr.mxu0 %v48
    %138 = vmatpush1.msra.mxu0 %v47
    %139 = vmatprep.subr.mxu0 %v46
    %140 = vmatpush1.msra.mxu0 %v45
    %141 = vmatprep.subr.mxu0 0.0
    %142 = vmatpush2.msra.mxu0 0.0
    %143 = vmatprep.subr.mxu0 0.0
    %144 = vmatpush2.msra.mxu0 0.0
    %145 = vmatprep.subr.mxu0 0.0
    %146 = vmatpush2.msra.mxu0 0.0
    %147 = vmatprep.subr.mxu0 0.0
    %148 = vmatpush2.msra.mxu0 0.0
    %149 = vmatprep.subr.mxu0 0.0
    %150 = vmatpush2.msra.mxu0 0.0
    %151 = vmatprep.subr.mxu0 0.0
    %152 = vmatpush2.msra.mxu0 0.0
    %153 = vmatprep.subr.mxu0 0.0
    %154 = vmatpush2.msra.mxu0 0.0
    %155 = vmatprep.subr.mxu0 0.0
    %156 = vmatpush2.msra.mxu0 0.0
    %157 = vmatprep.subr.mxu0 %v92
    %158 = vmatpush2.msra.mxu0 %v91
    %159 = vmatprep.subr.mxu0 %v90
    %160 = vmatpush2.msra.mxu0 %v89
    %161 = vmatprep.subr.mxu0 %v88
    %162 = vmatpush2.msra.mxu0 %v87
    %163 = vmatprep.subr.mxu0 %v86
    %164 = vmatpush2.msra.mxu0 %v85
    %165 = vmatprep.subr.mxu0 %v84
    %166 = vmatpush2.msra.mxu0 %v83
    %167 = vmatprep.subr.mxu0 %v82
    %168 = vmatpush2.msra.mxu0 %v81
    %169 = vmatprep.subr.mxu0 %v80
    %170 = vmatpush2.msra.mxu0 %v79
    %171 = vmatprep.subr.mxu0 %v78
    %172 = vmatpush2.msra.mxu0 %v77
    %173 = vmatprep.mubr.f32.mxu0 %v107
    %174 = vmatmul.mubr.f32.gmra.mxu0 0.0
    %v175 = vpop.f32.mrf.mxu0
    %v176 = vadd.f32 %v98, %v175
    %v177 = vpop.f32.mrf.mxu0
    %v178 = vadd.f32 %v102, %v177
    %179 = vdwg.mxu0
    %v180 = vld [vmem:[%s3] sm:$0x3]
    %182 = vset.pattern.permute.xlu0 0
    %183 = vperm.xlu0 %182, %v44
    %v184 = vpop.permute.xlu0 %183
    %v187 = vlaneseq
    %v188 = vshrl.u32 %v187, 7
    %v189 = vsub.s32 0, %v188
    %v190 = vrot.slane %v180, %v189
    %v191 = vlaneseq
    %v192 = vshrl.u32 %v191, 7
    %v193 = vsub.s32 1, %v192
    %v194 = vrot.slane %v180, %v193
    %v197 = vmul.f32 %v184, %v190
    %v198 = vmul.f32 %v184, %v194
    %v199 = vadd.f32 %v176, %v197
    %v200 = vadd.f32 %v178, %v198
    %v201 = vtanh.pop %v199
    %v202 = vtanh.pop %v200
    %v203 = vsel %vm42, %v201, 0.0
    %v204 = vsel %vm43, %v202, 0.0
    %vm205 = vcmp.lt.s32.totalorder %v40, 128
    %vm206 = vcmp.lt.s32.totalorder %v41, 128
    %v207 = vld [vmem:[%s0 + $0x8] sm:$0xff]
    %v209 = vsel %vm105, %v204, 0
    %211 = vmatprep.subr.mxu0 %v76
    %212 = vmatpush1.msra.mxu0 %v75
    %213 = vmatprep.subr.mxu0 %v74
    %214 = vmatpush1.msra.mxu0 %v73
    %215 = vmatprep.subr.mxu0 %v72
    %216 = vmatpush1.msra.mxu0 %v71
    %217 = vmatprep.subr.mxu0 %v70
    %218 = vmatpush1.msra.mxu0 %v69
    %219 = vmatprep.subr.mxu0 %v68
    %220 = vmatpush1.msra.mxu0 %v67
    %221 = vmatprep.subr.mxu0 %v66
    %222 = vmatpush1.msra.mxu0 %v65
    %223 = vmatprep.subr.mxu0 %v64
    %224 = vmatpush1.msra.mxu0 %v63
    %225 = vmatprep.subr.mxu0 %v62
    %226 = vmatpush1.msra.mxu0 %v61
    %227 = vmatprep.subr.mxu0 %v60
    %228 = vmatpush1.msra.mxu0 %v59
    %229 = vmatprep.subr.mxu0 %v58
    %230 = vmatpush1.msra.mxu0 %v57
    %231 = vmatprep.subr.mxu0 %v56
    %232 = vmatpush1.msra.mxu0 %v55
    %233 = vmatprep.subr.mxu0 %v54
    %234 = vmatpush1.msra.mxu0 %v53
    %235 = vmatprep.subr.mxu0 %v52
    %236 = vmatpush1.msra.mxu0 %v51
    %237 = vmatprep.subr.mxu0 %v50
    %238 = vmatpush1.msra.mxu0 %v49
    %239 = vmatprep.subr.mxu0 %v48
    %240 = vmatpush1.msra.mxu0 %v47
    %241 = vmatprep.subr.mxu0 %v46
    %242 = vmatpush1.msra.mxu0 %v45
    %243 = vmatprep.subr.mxu0 0.0
    %244 = vmatpush2.msra.mxu0 0.0
    %245 = vmatprep.subr.mxu0 0.0
    %246 = vmatpush2.msra.mxu0 0.0
    %247 = vmatprep.subr.mxu0 0.0
    %248 = vmatpush2.msra.mxu0 0.0
    %249 = vmatprep.subr.mxu0 0.0
    %250 = vmatpush2.msra.mxu0 0.0
    %251 = vmatprep.subr.mxu0 0.0
    %252 = vmatpush2.msra.mxu0 0.0
    %253 = vmatprep.subr.mxu0 0.0
    %254 = vmatpush2.msra.mxu0 0.0
    %255 = vmatprep.subr.mxu0 0.0
    %256 = vmatpush2.msra.mxu0 0.0
    %257 = vmatprep.subr.mxu0 0.0
    %258 = vmatpush2.msra.mxu0 0.0
    %259 = vmatprep.subr.mxu0 %v92
    %260 = vmatpush2.msra.mxu0 %v91
    %261 = vmatprep.subr.mxu0 %v90
    %262 = vmatpush2.msra.mxu0 %v89
    %263 = vmatprep.subr.mxu0 %v88
    %264 = vmatpush2.msra.mxu0 %v87
    %265 = vmatprep.subr.mxu0 %v86
    %266 = vmatpush2.msra.mxu0 %v85
    %267 = vmatprep.subr.mxu0 %v84
    %268 = vmatpush2.msra.mxu0 %v83
    %269 = vmatprep.subr.mxu0 %v82
    %270 = vmatpush2.msra.mxu0 %v81
    %271 = vmatprep.subr.mxu0 %v80
    %272 = vmatpush2.msra.mxu0 %v79
    %273 = vmatprep.subr.mxu0 %v78
    %274 = vmatpush2.msra.mxu0 %v77
    %275 = vmatprep.mubr.f32.mxu0 %v209
    %276 = vmatmul.mubr.f32.gmra.mxu0 %v203
    %v277 = vpop.f32.mrf.mxu0
    %v278 = vadd.f32 %v98, %v277
    %v279 = vpop.f32.mrf.mxu0
    %v280 = vadd.f32 %v102, %v279
    %281 = vdwg.mxu0
    %283 = vset.pattern.permute.xlu0 0
    %284 = vperm.xlu0 %283, %v207
    %v285 = vpop.permute.xlu0 %284
    %v287 = vmul.f32 %v285, %v190
    %v288 = vmul.f32 %v285, %v194
    %v289 = vadd.f32 %v278, %v287
    %v290 = vadd.f32 %v280, %v288
    %v291 = vtanh.pop %v289
    %v292 = vtanh.pop %v290
    %v293 = vsel %vm205, %v291, 0.0
    %v294 = vsel %vm206, %v292, 0.0
    %s295 = scalar_lea.vmem %s0, 16
    %v296 = vld [vmem:[%s295] sm:$0xff]
    %v298 = vsel %vm105, %v294, 0
    %300 = vmatprep.subr.mxu0 %v76
    %301 = vmatpush1.msra.mxu0 %v75
    %302 = vmatprep.subr.mxu0 %v74
    %303 = vmatpush1.msra.mxu0 %v73
    %304 = vmatprep.subr.mxu0 %v72
    %305 = vmatpush1.msra.mxu0 %v71
    %306 = vmatprep.subr.mxu0 %v70
    %307 = vmatpush1.msra.mxu0 %v69
    %308 = vmatprep.subr.mxu0 %v68
    %309 = vmatpush1.msra.mxu0 %v67
    %310 = vmatprep.subr.mxu0 %v66
    %311 = vmatpush1.msra.mxu0 %v65
    %312 = vmatprep.subr.mxu0 %v64
    %313 = vmatpush1.msra.mxu0 %v63
    %314 = vmatprep.subr.mxu0 %v62
    %315 = vmatpush1.msra.mxu0 %v61
    %316 = vmatprep.subr.mxu0 %v60
    %317 = vmatpush1.msra.mxu0 %v59
    %318 = vmatprep.subr.mxu0 %v58
    %319 = vmatpush1.msra.mxu0 %v57
    %320 = vmatprep.subr.mxu0 %v56
    %321 = vmatpush1.msra.mxu0 %v55
    %322 = vmatprep.subr.mxu0 %v54
    %323 = vmatpush1.msra.mxu0 %v53
    %324 = vmatprep.subr.mxu0 %v52
    %325 = vmatpush1.msra.mxu0 %v51
    %326 = vmatprep.subr.mxu0 %v50
    %327 = vmatpush1.msra.mxu0 %v49
    %328 = vmatprep.subr.mxu0 %v48
    %329 = vmatpush1.msra.mxu0 %v47
    %330 = vmatprep.subr.mxu0 %v46
    %331 = vmatpush1.msra.mxu0 %v45
    %332 = vmatprep.subr.mxu0 0.0
    %333 = vmatpush2.msra.mxu0 0.0
    %334 = vmatprep.subr.mxu0 0.0
    %335 = vmatpush2.msra.mxu0 0.0
    %336 = vmatprep.subr.mxu0 0.0
    %337 = vmatpush2.msra.mxu0 0.0
    %338 = vmatprep.subr.mxu0 0.0
    %339 = vmatpush2.msra.mxu0 0.0
    %340 = vmatprep.subr.mxu0 0.0
    %341 = vmatpush2.msra.mxu0 0.0
    %342 = vmatprep.subr.mxu0 0.0
    %343 = vmatpush2.msra.mxu0 0.0
    %344 = vmatprep.subr.mxu0 0.0
    %345 = vmatpush2.msra.mxu0 0.0
    %346 = vmatprep.subr.mxu0 0.0
    %347 = vmatpush2.msra.mxu0 0.0
    %348 = vmatprep.subr.mxu0 %v92
    %349 = vmatpush2.msra.mxu0 %v91
    %350 = vmatprep.subr.mxu0 %v90
    %351 = vmatpush2.msra.mxu0 %v89
    %352 = vmatprep.subr.mxu0 %v88
    %353 = vmatpush2.msra.mxu0 %v87
    %354 = vmatprep.subr.mxu0 %v86
    %355 = vmatpush2.msra.mxu0 %v85
    %356 = vmatprep.subr.mxu0 %v84
    %357 = vmatpush2.msra.mxu0 %v83
    %358 = vmatprep.subr.mxu0 %v82
    %359 = vmatpush2.msra.mxu0 %v81
    %360 = vmatprep.subr.mxu0 %v80
    %361 = vmatpush2.msra.mxu0 %v79
    %362 = vmatprep.subr.mxu0 %v78
    %363 = vmatpush2.msra.mxu0 %v77
    %364 = vmatprep.mubr.f32.mxu0 %v298
    %365 = vmatmul.mubr.f32.gmra.mxu0 %v293
    %v366 = vpop.f32.mrf.mxu0
    %v367 = vadd.f32 %v98, %v366
    %v368 = vpop.f32.mrf.mxu0
    %v369 = vadd.f32 %v102, %v368
    %370 = vdwg.mxu0
    %372 = vset.pattern.permute.xlu0 0
    %373 = vperm.xlu0 %372, %v296
    %v374 = vpop.permute.xlu0 %373
    %v376 = vmul.f32 %v374, %v190
    %v377 = vmul.f32 %v374, %v194
    %v378 = vadd.f32 %v367, %v376
    %v379 = vadd.f32 %v369, %v377
    %v380 = vtanh.pop %v378
    %v381 = vtanh.pop %v379
    %s382 = scalar_lea.vmem %s0, 24
    %v383 = vld [vmem:[%s382] sm:$0xff]
    %v385 = vsel %vm105, %v381, 0
    %387 = vmatprep.subr.mxu0 %v76
    %388 = vmatpush1.msra.mxu0 %v75
    %389 = vmatprep.subr.mxu0 %v74
    %390 = vmatpush1.msra.mxu0 %v73
    %391 = vmatprep.subr.mxu0 %v72
    %392 = vmatpush1.msra.mxu0 %v71
    %393 = vmatprep.subr.mxu0 %v70
    %394 = vmatpush1.msra.mxu0 %v69
    %395 = vmatprep.subr.mxu0 %v68
    %396 = vmatpush1.msra.mxu0 %v67
    %397 = vmatprep.subr.mxu0 %v66
    %398 = vmatpush1.msra.mxu0 %v65
    %399 = vmatprep.subr.mxu0 %v64
    %400 = vmatpush1.msra.mxu0 %v63
    %401 = vmatprep.subr.mxu0 %v62
    %402 = vmatpush1.msra.mxu0 %v61
    %403 = vmatprep.subr.mxu0 %v60
    %404 = vmatpush1.msra.mxu0 %v59
    %405 = vmatprep.subr.mxu0 %v58
    %406 = vmatpush1.msra.mxu0 %v57
    %407 = vmatprep.subr.mxu0 %v56
    %408 = vmatpush1.msra.mxu0 %v55
    %409 = vmatprep.subr.mxu0 %v54
    %410 = vmatpush1.msra.mxu0 %v53
    %411 = vmatprep.subr.mxu0 %v52
    %412 = vmatpush1.msra.mxu0 %v51
    %413 = vmatprep.subr.mxu0 %v50
    %414 = vmatpush1.msra.mxu0 %v49
    %415 = vmatprep.subr.mxu0 %v48
    %416 = vmatpush1.msra.mxu0 %v47
    %417 = vmatprep.subr.mxu0 %v46
    %418 = vmatpush1.msra.mxu0 %v45
    %419 = vmatprep.subr.mxu0 0.0
    %420 = vmatpush2.msra.mxu0 0.0
    %421 = vmatprep.subr.mxu0 0.0
    %422 = vmatpush2.msra.mxu0 0.0
    %423 = vmatprep.subr.mxu0 0.0
    %424 = vmatpush2.msra.mxu0 0.0
    %425 = vmatprep.subr.mxu0 0.0
    %426 = vmatpush2.msra.mxu0 0.0
    %427 = vmatprep.subr.mxu0 0.0
    %428 = vmatpush2.msra.mxu0 0.0
    %429 = vmatprep.subr.mxu0 0.0
    %430 = vmatpush2.msra.mxu0 0.0
    %431 = vmatprep.subr.mxu0 0.0
    %432 = vmatpush2.msra.mxu0 0.0
    %433 = vmatprep.subr.mxu0 0.0
    %434 = vmatpush2.msra.mxu0 0.0
    %435 = vmatprep.subr.mxu0 %v92
    %436 = vmatpush2.msra.mxu0 %v91
    %437 = vmatprep.subr.mxu0 %v90
    %438 = vmatpush2.msra.mxu0 %v89
    %439 = vmatprep.subr.mxu0 %v88
    %440 = vmatpush2.msra.mxu0 %v87
    %441 = vmatprep.subr.mxu0 %v86
    %442 = vmatpush2.msra.mxu0 %v85
    %443 = vmatprep.subr.mxu0 %v84
    %444 = vmatpush2.msra.mxu0 %v83
    %445 = vmatprep.subr.mxu0 %v82
    %446 = vmatpush2.msra.mxu0 %v81
    %447 = vmatprep.subr.mxu0 %v80
    %448 = vmatpush2.msra.mxu0 %v79
    %449 = vmatprep.subr.mxu0 %v78
    %450 = vmatpush2.msra.mxu0 %v77
    %451 = vmatprep.mubr.f32.mxu0 %v385
    %452 = vmatmul.mubr.f32.gmra.mxu0 %v380
    %v453 = vpop.f32.mrf.mxu0
    %v454 = vadd.f32 %v98, %v453
    %v455 = vpop.f32.mrf.mxu0
    %v456 = vadd.f32 %v102, %v455
    %457 = vdwg.mxu0
    %459 = vset.pattern.permute.xlu0 0
    %460 = vperm.xlu0 %459, %v383
    %v461 = vpop.permute.xlu0 %460
    %v463 = vmul.f32 %v461, %v190
    %v464 = vmul.f32 %v461, %v194
    %v465 = vadd.f32 %v454, %v463
    %v466 = vadd.f32 %v456, %v464
    %v467 = vtanh.pop %v465
    %v468 = vtanh.pop %v466
    %s469 = scalar_lea.vmem %s0, 32
    %v470 = vld [vmem:[%s469] sm:$0xff]
    %v472 = vsel %vm105, %v468, 0
    %474 = vmatprep.subr.mxu0 %v76
    %475 = vmatpush1.msra.mxu0 %v75
    %476 = vmatprep.subr.mxu0 %v74
    %477 = vmatpush1.msra.mxu0 %v73
    %478 = vmatprep.subr.mxu0 %v72
    %479 = vmatpush1.msra.mxu0 %v71
    %480 = vmatprep.subr.mxu0 %v70
    %481 = vmatpush1.msra.mxu0 %v69
    %482 = vmatprep.subr.mxu0 %v68
    %483 = vmatpush1.msra.mxu0 %v67
    %484 = vmatprep.subr.mxu0 %v66
    %485 = vmatpush1.msra.mxu0 %v65
    %486 = vmatprep.subr.mxu0 %v64
    %487 = vmatpush1.msra.mxu0 %v63
    %488 = vmatprep.subr.mxu0 %v62
    %489 = vmatpush1.msra.mxu0 %v61
    %490 = vmatprep.subr.mxu0 %v60
    %491 = vmatpush1.msra.mxu0 %v59
    %492 = vmatprep.subr.mxu0 %v58
    %493 = vmatpush1.msra.mxu0 %v57
    %494 = vmatprep.subr.mxu0 %v56
    %495 = vmatpush1.msra.mxu0 %v55
    %496 = vmatprep.subr.mxu0 %v54
    %497 = vmatpush1.msra.mxu0 %v53
    %498 = vmatprep.subr.mxu0 %v52
    %499 = vmatpush1.msra.mxu0 %v51
    %500 = vmatprep.subr.mxu0 %v50
    %501 = vmatpush1.msra.mxu0 %v49
    %502 = vmatprep.subr.mxu0 %v48
    %503 = vmatpush1.msra.mxu0 %v47
    %504 = vmatprep.subr.mxu0 %v46
    %505 = vmatpush1.msra.mxu0 %v45
    %506 = vmatprep.subr.mxu0 0.0
    %507 = vmatpush2.msra.mxu0 0.0
    %508 = vmatprep.subr.mxu0 0.0
    %509 = vmatpush2.msra.mxu0 0.0
    %510 = vmatprep.subr.mxu0 0.0
    %511 = vmatpush2.msra.mxu0 0.0
    %512 = vmatprep.subr.mxu0 0.0
    %513 = vmatpush2.msra.mxu0 0.0
    %514 = vmatprep.subr.mxu0 0.0
    %515 = vmatpush2.msra.mxu0 0.0
    %516 = vmatprep.subr.mxu0 0.0
    %517 = vmatpush2.msra.mxu0 0.0
    %518 = vmatprep.subr.mxu0 0.0
    %519 = vmatpush2.msra.mxu0 0.0
    %520 = vmatprep.subr.mxu0 0.0
    %521 = vmatpush2.msra.mxu0 0.0
    %522 = vmatprep.subr.mxu0 %v92
    %523 = vmatpush2.msra.mxu0 %v91
    %524 = vmatprep.subr.mxu0 %v90
    %525 = vmatpush2.msra.mxu0 %v89
    %526 = vmatprep.subr.mxu0 %v88
    %527 = vmatpush2.msra.mxu0 %v87
    %528 = vmatprep.subr.mxu0 %v86
    %529 = vmatpush2.msra.mxu0 %v85
    %530 = vmatprep.subr.mxu0 %v84
    %531 = vmatpush2.msra.mxu0 %v83
    %532 = vmatprep.subr.mxu0 %v82
    %533 = vmatpush2.msra.mxu0 %v81
    %534 = vmatprep.subr.mxu0 %v80
    %535 = vmatpush2.msra.mxu0 %v79
    %536 = vmatprep.subr.mxu0 %v78
    %537 = vmatpush2.msra.mxu0 %v77
    %538 = vmatprep.mubr.f32.mxu0 %v472
    %539 = vmatmul.mubr.f32.gmra.mxu0 %v467
    %v540 = vpop.f32.mrf.mxu0
    %v541 = vadd.f32 %v98, %v540
    %v542 = vpop.f32.mrf.mxu0
    %v543 = vadd.f32 %v102, %v542
    %544 = vdwg.mxu0
    %546 = vset.pattern.permute.xlu0 0
    %547 = vperm.xlu0 %546, %v470
    %v548 = vpop.permute.xlu0 %547
    %v550 = vmul.f32 %v548, %v190
    %v551 = vmul.f32 %v548, %v194
    %v552 = vadd.f32 %v541, %v550
    %v553 = vadd.f32 %v543, %v551
    %v554 = vtanh.pop %v552
    %v555 = vtanh.pop %v553
    %s556 = scalar_lea.vmem %s0, 40
    %v557 = vld [vmem:[%s556] sm:$0xff]
    %v559 = vsel %vm105, %v555, 0
    %561 = vmatprep.subr.mxu0 %v76
    %562 = vmatpush1.msra.mxu0 %v75
    %563 = vmatprep.subr.mxu0 %v74
    %564 = vmatpush1.msra.mxu0 %v73
    %565 = vmatprep.subr.mxu0 %v72
    %566 = vmatpush1.msra.mxu0 %v71
    %567 = vmatprep.subr.mxu0 %v70
    %568 = vmatpush1.msra.mxu0 %v69
    %569 = vmatprep.subr.mxu0 %v68
    %570 = vmatpush1.msra.mxu0 %v67
    %571 = vmatprep.subr.mxu0 %v66
    %572 = vmatpush1.msra.mxu0 %v65
    %573 = vmatprep.subr.mxu0 %v64
    %574 = vmatpush1.msra.mxu0 %v63
    %575 = vmatprep.subr.mxu0 %v62
    %576 = vmatpush1.msra.mxu0 %v61
    %577 = vmatprep.subr.mxu0 %v60
    %578 = vmatpush1.msra.mxu0 %v59
    %579 = vmatprep.subr.mxu0 %v58
    %580 = vmatpush1.msra.mxu0 %v57
    %581 = vmatprep.subr.mxu0 %v56
    %582 = vmatpush1.msra.mxu0 %v55
    %583 = vmatprep.subr.mxu0 %v54
    %584 = vmatpush1.msra.mxu0 %v53
    %585 = vmatprep.subr.mxu0 %v52
    %586 = vmatpush1.msra.mxu0 %v51
    %587 = vmatprep.subr.mxu0 %v50
    %588 = vmatpush1.msra.mxu0 %v49
    %589 = vmatprep.subr.mxu0 %v48
    %590 = vmatpush1.msra.mxu0 %v47
    %591 = vmatprep.subr.mxu0 %v46
    %592 = vmatpush1.msra.mxu0 %v45
    %593 = vmatprep.subr.mxu0 0.0
    %594 = vmatpush2.msra.mxu0 0.0
    %595 = vmatprep.subr.mxu0 0.0
    %596 = vmatpush2.msra.mxu0 0.0
    %597 = vmatprep.subr.mxu0 0.0
    %598 = vmatpush2.msra.mxu0 0.0
    %599 = vmatprep.subr.mxu0 0.0
    %600 = vmatpush2.msra.mxu0 0.0
    %601 = vmatprep.subr.mxu0 0.0
    %602 = vmatpush2.msra.mxu0 0.0
    %603 = vmatprep.subr.mxu0 0.0
    %604 = vmatpush2.msra.mxu0 0.0
    %605 = vmatprep.subr.mxu0 0.0
    %606 = vmatpush2.msra.mxu0 0.0
    %607 = vmatprep.subr.mxu0 0.0
    %608 = vmatpush2.msra.mxu0 0.0
    %609 = vmatprep.subr.mxu0 %v92
    %610 = vmatpush2.msra.mxu0 %v91
    %611 = vmatprep.subr.mxu0 %v90
    %612 = vmatpush2.msra.mxu0 %v89
    %613 = vmatprep.subr.mxu0 %v88
    %614 = vmatpush2.msra.mxu0 %v87
    %615 = vmatprep.subr.mxu0 %v86
    %616 = vmatpush2.msra.mxu0 %v85
    %617 = vmatprep.subr.mxu0 %v84
    %618 = vmatpush2.msra.mxu0 %v83
    %619 = vmatprep.subr.mxu0 %v82
    %620 = vmatpush2.msra.mxu0 %v81
    %621 = vmatprep.subr.mxu0 %v80
    %622 = vmatpush2.msra.mxu0 %v79
    %623 = vmatprep.subr.mxu0 %v78
    %624 = vmatpush2.msra.mxu0 %v77
    %625 = vmatprep.mubr.f32.mxu0 %v559
    %626 = vmatmul.mubr.f32.gmra.mxu0 %v554
    %v627 = vpop.f32.mrf.mxu0
    %v628 = vadd.f32 %v98, %v627
    %v629 = vpop.f32.mrf.mxu0
    %v630 = vadd.f32 %v102, %v629
    %631 = vdwg.mxu0
    %633 = vset.pattern.permute.xlu0 0
    %634 = vperm.xlu0 %633, %v557
    %v635 = vpop.permute.xlu0 %634
    %v637 = vmul.f32 %v635, %v190
    %v638 = vmul.f32 %v635, %v194
    %v639 = vadd.f32 %v628, %v637
    %v640 = vadd.f32 %v630, %v638
    %v641 = vtanh.pop %v639
    %v642 = vtanh.pop %v640
    %s643 = scalar_lea.vmem %s0, 48
    %v644 = vld [vmem:[%s643] sm:$0xff]
    %v646 = vsel %vm105, %v642, 0
    %648 = vmatprep.subr.mxu0 %v76
    %649 = vmatpush1.msra.mxu0 %v75
    %650 = vmatprep.subr.mxu0 %v74
    %651 = vmatpush1.msra.mxu0 %v73
    %652 = vmatprep.subr.mxu0 %v72
    %653 = vmatpush1.msra.mxu0 %v71
    %654 = vmatprep.subr.mxu0 %v70
    %655 = vmatpush1.msra.mxu0 %v69
    %656 = vmatprep.subr.mxu0 %v68
    %657 = vmatpush1.msra.mxu0 %v67
    %658 = vmatprep.subr.mxu0 %v66
    %659 = vmatpush1.msra.mxu0 %v65
    %660 = vmatprep.subr.mxu0 %v64
    %661 = vmatpush1.msra.mxu0 %v63
    %662 = vmatprep.subr.mxu0 %v62
    %663 = vmatpush1.msra.mxu0 %v61
    %664 = vmatprep.subr.mxu0 %v60
    %665 = vmatpush1.msra.mxu0 %v59
    %666 = vmatprep.subr.mxu0 %v58
    %667 = vmatpush1.msra.mxu0 %v57
    %668 = vmatprep.subr.mxu0 %v56
    %669 = vmatpush1.msra.mxu0 %v55
    %670 = vmatprep.subr.mxu0 %v54
    %671 = vmatpush1.msra.mxu0 %v53
    %672 = vmatprep.subr.mxu0 %v52
    %673 = vmatpush1.msra.mxu0 %v51
    %674 = vmatprep.subr.mxu0 %v50
    %675 = vmatpush1.msra.mxu0 %v49
    %676 = vmatprep.subr.mxu0 %v48
    %677 = vmatpush1.msra.mxu0 %v47
    %678 = vmatprep.subr.mxu0 %v46
    %679 = vmatpush1.msra.mxu0 %v45
    %680 = vmatprep.subr.mxu0 0.0
    %681 = vmatpush2.msra.mxu0 0.0
    %682 = vmatprep.subr.mxu0 0.0
    %683 = vmatpush2.msra.mxu0 0.0
    %684 = vmatprep.subr.mxu0 0.0
    %685 = vmatpush2.msra.mxu0 0.0
    %686 = vmatprep.subr.mxu0 0.0
    %687 = vmatpush2.msra.mxu0 0.0
    %688 = vmatprep.subr.mxu0 0.0
    %689 = vmatpush2.msra.mxu0 0.0
    %690 = vmatprep.subr.mxu0 0.0
    %691 = vmatpush2.msra.mxu0 0.0
    %692 = vmatprep.subr.mxu0 0.0
    %693 = vmatpush2.msra.mxu0 0.0
    %694 = vmatprep.subr.mxu0 0.0
    %695 = vmatpush2.msra.mxu0 0.0
    %696 = vmatprep.subr.mxu0 %v92
    %697 = vmatpush2.msra.mxu0 %v91
    %698 = vmatprep.subr.mxu0 %v90
    %699 = vmatpush2.msra.mxu0 %v89
    %700 = vmatprep.subr.mxu0 %v88
    %701 = vmatpush2.msra.mxu0 %v87
    %702 = vmatprep.subr.mxu0 %v86
    %703 = vmatpush2.msra.mxu0 %v85
    %704 = vmatprep.subr.mxu0 %v84
    %705 = vmatpush2.msra.mxu0 %v83
    %706 = vmatprep.subr.mxu0 %v82
    %707 = vmatpush2.msra.mxu0 %v81
    %708 = vmatprep.subr.mxu0 %v80
    %709 = vmatpush2.msra.mxu0 %v79
    %710 = vmatprep.subr.mxu0 %v78
    %711 = vmatpush2.msra.mxu0 %v77
    %712 = vmatprep.mubr.f32.mxu0 %v646
    %713 = vmatmul.mubr.f32.gmra.mxu0 %v641
    %v714 = vpop.f32.mrf.mxu0
    %v715 = vadd.f32 %v98, %v714
    %v716 = vpop.f32.mrf.mxu0
    %v717 = vadd.f32 %v102, %v716
    %718 = vdwg.mxu0
    %720 = vset.pattern.permute.xlu0 0
    %721 = vperm.xlu0 %720, %v644
    %v722 = vpop.permute.xlu0 %721
    %v724 = vmul.f32 %v722, %v190
    %v725 = vmul.f32 %v722, %v194
    %v726 = vadd.f32 %v715, %v724
    %v727 = vadd.f32 %v717, %v725
    %v728 = vtanh.pop %v726
    %v729 = vtanh.pop %v727
    %s730 = scalar_lea.vmem %s0, 56
    %v731 = vld [vmem:[%s730] sm:$0xff]
    %v733 = vsel %vm105, %v729, 0
    %735 = vmatprep.subr.mxu0 %v76
    %736 = vmatpush1.msra.mxu0 %v75
    %737 = vmatprep.subr.mxu0 %v74
    %738 = vmatpush1.msra.mxu0 %v73
    %739 = vmatprep.subr.mxu0 %v72
    %740 = vmatpush1.msra.mxu0 %v71
    %741 = vmatprep.subr.mxu0 %v70
    %742 = vmatpush1.msra.mxu0 %v69
    %743 = vmatprep.subr.mxu0 %v68
    %744 = vmatpush1.msra.mxu0 %v67
    %745 = vmatprep.subr.mxu0 %v66
    %746 = vmatpush1.msra.mxu0 %v65
    %747 = vmatprep.subr.mxu0 %v64
    %748 = vmatpush1.msra.mxu0 %v63
    %749 = vmatprep.subr.mxu0 %v62
    %750 = vmatpush1.msra.mxu0 %v61
    %751 = vmatprep.subr.mxu0 %v60
    %752 = vmatpush1.msra.mxu0 %v59
    %753 = vmatprep.subr.mxu0 %v58
    %754 = vmatpush1.msra.mxu0 %v57
    %755 = vmatprep.subr.mxu0 %v56
    %756 = vmatpush1.msra.mxu0 %v55
    %757 = vmatprep.subr.mxu0 %v54
    %758 = vmatpush1.msra.mxu0 %v53
    %759 = vmatprep.subr.mxu0 %v52
    %760 = vmatpush1.msra.mxu0 %v51
    %761 = vmatprep.subr.mxu0 %v50
    %762 = vmatpush1.msra.mxu0 %v49
    %763 = vmatprep.subr.mxu0 %v48
    %764 = vmatpush1.msra.mxu0 %v47
    %765 = vmatprep.subr.mxu0 %v46
    %766 = vmatpush1.msra.mxu0 %v45
    %767 = vmatprep.subr.mxu0 0.0
    %768 = vmatpush2.msra.mxu0 0.0
    %769 = vmatprep.subr.mxu0 0.0
    %770 = vmatpush2.msra.mxu0 0.0
    %771 = vmatprep.subr.mxu0 0.0
    %772 = vmatpush2.msra.mxu0 0.0
    %773 = vmatprep.subr.mxu0 0.0
    %774 = vmatpush2.msra.mxu0 0.0
    %775 = vmatprep.subr.mxu0 0.0
    %776 = vmatpush2.msra.mxu0 0.0
    %777 = vmatprep.subr.mxu0 0.0
    %778 = vmatpush2.msra.mxu0 0.0
    %779 = vmatprep.subr.mxu0 0.0
    %780 = vmatpush2.msra.mxu0 0.0
    %781 = vmatprep.subr.mxu0 0.0
    %782 = vmatpush2.msra.mxu0 0.0
    %783 = vmatprep.subr.mxu0 %v92
    %784 = vmatpush2.msra.mxu0 %v91
    %785 = vmatprep.subr.mxu0 %v90
    %786 = vmatpush2.msra.mxu0 %v89
    %787 = vmatprep.subr.mxu0 %v88
    %788 = vmatpush2.msra.mxu0 %v87
    %789 = vmatprep.subr.mxu0 %v86
    %790 = vmatpush2.msra.mxu0 %v85
    %791 = vmatprep.subr.mxu0 %v84
    %792 = vmatpush2.msra.mxu0 %v83
    %793 = vmatprep.subr.mxu0 %v82
    %794 = vmatpush2.msra.mxu0 %v81
    %795 = vmatprep.subr.mxu0 %v80
    %796 = vmatpush2.msra.mxu0 %v79
    %797 = vmatprep.subr.mxu0 %v78
    %798 = vmatpush2.msra.mxu0 %v77
    %799 = vmatprep.mubr.f32.mxu0 %v733
    %800 = vmatmul.mubr.f32.gmra.mxu0 %v728
    %v801 = vpop.f32.mrf.mxu0
    %v802 = vadd.f32 %v98, %v801
    %v803 = vpop.f32.mrf.mxu0
    %v804 = vadd.f32 %v102, %v803
    %805 = vdwg.mxu0
    %807 = vset.pattern.permute.xlu0 0
    %808 = vperm.xlu0 %807, %v731
    %v809 = vpop.permute.xlu0 %808
    %v811 = vmul.f32 %v809, %v190
    %v812 = vmul.f32 %v809, %v194
    %v813 = vadd.f32 %v802, %v811
    %v814 = vadd.f32 %v804, %v812
    %v815 = vtanh.pop %v813
    %v816 = vtanh.pop %v814
    %s817 = scalar_lea.vmem %s0, 64
    %v818 = vld [vmem:[%s817] sm:$0xff]
    %v820 = vsel %vm105, %v816, 0
    %822 = vmatprep.subr.mxu0 %v76
    %823 = vmatpush1.msra.mxu0 %v75
    %824 = vmatprep.subr.mxu0 %v74
    %825 = vmatpush1.msra.mxu0 %v73
    %826 = vmatprep.subr.mxu0 %v72
    %827 = vmatpush1.msra.mxu0 %v71
    %828 = vmatprep.subr.mxu0 %v70
    %829 = vmatpush1.msra.mxu0 %v69
    %830 = vmatprep.subr.mxu0 %v68
    %831 = vmatpush1.msra.mxu0 %v67
    %832 = vmatprep.subr.mxu0 %v66
    %833 = vmatpush1.msra.mxu0 %v65
    %834 = vmatprep.subr.mxu0 %v64
    %835 = vmatpush1.msra.mxu0 %v63
    %836 = vmatprep.subr.mxu0 %v62
    %837 = vmatpush1.msra.mxu0 %v61
    %838 = vmatprep.subr.mxu0 %v60
    %839 = vmatpush1.msra.mxu0 %v59
    %840 = vmatprep.subr.mxu0 %v58
    %841 = vmatpush1.msra.mxu0 %v57
    %842 = vmatprep.subr.mxu0 %v56
    %843 = vmatpush1.msra.mxu0 %v55
    %844 = vmatprep.subr.mxu0 %v54
    %845 = vmatpush1.msra.mxu0 %v53
    %846 = vmatprep.subr.mxu0 %v52
    %847 = vmatpush1.msra.mxu0 %v51
    %848 = vmatprep.subr.mxu0 %v50
    %849 = vmatpush1.msra.mxu0 %v49
    %850 = vmatprep.subr.mxu0 %v48
    %851 = vmatpush1.msra.mxu0 %v47
    %852 = vmatprep.subr.mxu0 %v46
    %853 = vmatpush1.msra.mxu0 %v45
    %854 = vmatprep.subr.mxu0 0.0
    %855 = vmatpush2.msra.mxu0 0.0
    %856 = vmatprep.subr.mxu0 0.0
    %857 = vmatpush2.msra.mxu0 0.0
    %858 = vmatprep.subr.mxu0 0.0
    %859 = vmatpush2.msra.mxu0 0.0
    %860 = vmatprep.subr.mxu0 0.0
    %861 = vmatpush2.msra.mxu0 0.0
    %862 = vmatprep.subr.mxu0 0.0
    %863 = vmatpush2.msra.mxu0 0.0
    %864 = vmatprep.subr.mxu0 0.0
    %865 = vmatpush2.msra.mxu0 0.0
    %866 = vmatprep.subr.mxu0 0.0
    %867 = vmatpush2.msra.mxu0 0.0
    %868 = vmatprep.subr.mxu0 0.0
    %869 = vmatpush2.msra.mxu0 0.0
    %870 = vmatprep.subr.mxu0 %v92
    %871 = vmatpush2.msra.mxu0 %v91
    %872 = vmatprep.subr.mxu0 %v90
    %873 = vmatpush2.msra.mxu0 %v89
    %874 = vmatprep.subr.mxu0 %v88
    %875 = vmatpush2.msra.mxu0 %v87
    %876 = vmatprep.subr.mxu0 %v86
    %877 = vmatpush2.msra.mxu0 %v85
    %878 = vmatprep.subr.mxu0 %v84
    %879 = vmatpush2.msra.mxu0 %v83
    %880 = vmatprep.subr.mxu0 %v82
    %881 = vmatpush2.msra.mxu0 %v81
    %882 = vmatprep.subr.mxu0 %v80
    %883 = vmatpush2.msra.mxu0 %v79
    %884 = vmatprep.subr.mxu0 %v78
    %885 = vmatpush2.msra.mxu0 %v77
    %886 = vmatprep.mubr.f32.mxu0 %v820
    %887 = vmatmul.mubr.f32.gmra.mxu0 %v815
    %v888 = vpop.f32.mrf.mxu0
    %v889 = vadd.f32 %v98, %v888
    %v890 = vpop.f32.mrf.mxu0
    %v891 = vadd.f32 %v102, %v890
    %892 = vdwg.mxu0
    %894 = vset.pattern.permute.xlu0 0
    %895 = vperm.xlu0 %894, %v818
    %v896 = vpop.permute.xlu0 %895
    %v898 = vmul.f32 %v896, %v190
    %v899 = vmul.f32 %v896, %v194
    %v900 = vadd.f32 %v889, %v898
    %v901 = vadd.f32 %v891, %v899
    %v902 = vtanh.pop %v900
    %v903 = vtanh.pop %v901
    %s904 = scalar_lea.vmem %s0, 72
    %v905 = vld [vmem:[%s904] sm:$0xff]
    %v907 = vsel %vm105, %v903, 0
    %909 = vmatprep.subr.mxu0 %v76
    %910 = vmatpush1.msra.mxu0 %v75
    %911 = vmatprep.subr.mxu0 %v74
    %912 = vmatpush1.msra.mxu0 %v73
    %913 = vmatprep.subr.mxu0 %v72
    %914 = vmatpush1.msra.mxu0 %v71
    %915 = vmatprep.subr.mxu0 %v70
    %916 = vmatpush1.msra.mxu0 %v69
    %917 = vmatprep.subr.mxu0 %v68
    %918 = vmatpush1.msra.mxu0 %v67
    %919 = vmatprep.subr.mxu0 %v66
    %920 = vmatpush1.msra.mxu0 %v65
    %921 = vmatprep.subr.mxu0 %v64
    %922 = vmatpush1.msra.mxu0 %v63
    %923 = vmatprep.subr.mxu0 %v62
    %924 = vmatpush1.msra.mxu0 %v61
    %925 = vmatprep.subr.mxu0 %v60
    %926 = vmatpush1.msra.mxu0 %v59
    %927 = vmatprep.subr.mxu0 %v58
    %928 = vmatpush1.msra.mxu0 %v57
    %929 = vmatprep.subr.mxu0 %v56
    %930 = vmatpush1.msra.mxu0 %v55
    %931 = vmatprep.subr.mxu0 %v54
    %932 = vmatpush1.msra.mxu0 %v53
    %933 = vmatprep.subr.mxu0 %v52
    %934 = vmatpush1.msra.mxu0 %v51
    %935 = vmatprep.subr.mxu0 %v50
    %936 = vmatpush1.msra.mxu0 %v49
    %937 = vmatprep.subr.mxu0 %v48
    %938 = vmatpush1.msra.mxu0 %v47
    %939 = vmatprep.subr.mxu0 %v46
    %940 = vmatpush1.msra.mxu0 %v45
    %941 = vmatprep.subr.mxu0 0.0
    %942 = vmatpush2.msra.mxu0 0.0
    %943 = vmatprep.subr.mxu0 0.0
    %944 = vmatpush2.msra.mxu0 0.0
    %945 = vmatprep.subr.mxu0 0.0
    %946 = vmatpush2.msra.mxu0 0.0
    %947 = vmatprep.subr.mxu0 0.0
    %948 = vmatpush2.msra.mxu0 0.0
    %949 = vmatprep.subr.mxu0 0.0
    %950 = vmatpush2.msra.mxu0 0.0
    %951 = vmatprep.subr.mxu0 0.0
    %952 = vmatpush2.msra.mxu0 0.0
    %953 = vmatprep.subr.mxu0 0.0
    %954 = vmatpush2.msra.mxu0 0.0
    %955 = vmatprep.subr.mxu0 0.0
    %956 = vmatpush2.msra.mxu0 0.0
    %957 = vmatprep.subr.mxu0 %v92
    %958 = vmatpush2.msra.mxu0 %v91
    %959 = vmatprep.subr.mxu0 %v90
    %960 = vmatpush2.msra.mxu0 %v89
    %961 = vmatprep.subr.mxu0 %v88
    %962 = vmatpush2.msra.mxu0 %v87
    %963 = vmatprep.subr.mxu0 %v86
    %964 = vmatpush2.msra.mxu0 %v85
    %965 = vmatprep.subr.mxu0 %v84
    %966 = vmatpush2.msra.mxu0 %v83
    %967 = vmatprep.subr.mxu0 %v82
    %968 = vmatpush2.msra.mxu0 %v81
    %969 = vmatprep.subr.mxu0 %v80
    %970 = vmatpush2.msra.mxu0 %v79
    %971 = vmatprep.subr.mxu0 %v78
    %972 = vmatpush2.msra.mxu0 %v77
    %973 = vmatprep.mubr.f32.mxu0 %v907
    %974 = vmatmul.mubr.f32.gmra.mxu0 %v902
    %v975 = vpop.f32.mrf.mxu0
    %v976 = vpop.f32.mrf.mxu0
    %v977 = vadd.f32 %v102, %v976
    %978 = vdwg.mxu0
    %980 = vset.pattern.permute.xlu0 0
    %981 = vperm.xlu0 %980, %v905
    %v982 = vpop.permute.xlu0 %981
    %v984 = vmul.f32 %v982, %v194
    %v985 = vadd.f32 %v977, %v984
    %v986 = vtanh.pop %v985
    %v987 = vld [vmem:[%s4] sm:$0xff]
    %v988 = vld [vmem:[%s4 + $0x8] sm:$0xff]
    %v989 = vld [vmem:[%s4 + $0x10] sm:$0xff]
    %v990 = vld [vmem:[%s4 + $0x18] sm:$0xff]
    %v991 = vld [vmem:[%s4 + $0x20] sm:$0xff]
    %v992 = vld [vmem:[%s4 + $0x28] sm:$0xff]
    %v993 = vld [vmem:[%s4 + $0x30] sm:$0xff]
    %v994 = vld [vmem:[%s4 + $0x38] sm:$0xff]
    %v995 = vld [vmem:[#allocation2] sm:$0x1]
    %v997 = vlaneseq
    %v998 = vshrl.u32 %v997, 7
    %v999 = vsub.s32 0, %v998
    %v1000 = vrot.slane %v995, %v999
    %v1003 = vsel %vm105, %v986, 0
    %1005 = vmatprep.subr.mxu0 0.0
    %1006 = vmatpush1.msra.mxu0 0.0
    %1007 = vmatprep.subr.mxu0 0.0
    %1008 = vmatpush1.msra.mxu0 0.0
    %1009 = vmatprep.subr.mxu0 0.0
    %1010 = vmatpush1.msra.mxu0 0.0
    %1011 = vmatprep.subr.mxu0 0.0
    %1012 = vmatpush1.msra.mxu0 0.0
    %1013 = vmatprep.subr.mxu0 0.0
    %1014 = vmatpush1.msra.mxu0 0.0
    %1015 = vmatprep.subr.mxu0 0.0
    %1016 = vmatpush1.msra.mxu0 0.0
    %1017 = vmatprep.subr.mxu0 0.0
    %1018 = vmatpush1.msra.mxu0 0.0
    %1019 = vmatprep.subr.mxu0 0.0
    %1020 = vmatpush1.msra.mxu0 0.0
    %1021 = vmatprep.subr.mxu0 0.0
    %1022 = vmatpush1.msra.mxu0 %v994
    %1023 = vmatprep.subr.mxu0 0.0
    %1024 = vmatpush1.msra.mxu0 %v993
    %1025 = vmatprep.subr.mxu0 0.0
    %1026 = vmatpush1.msra.mxu0 %v992
    %1027 = vmatprep.subr.mxu0 0.0
    %1028 = vmatpush1.msra.mxu0 %v991
    %1029 = vmatprep.subr.mxu0 0.0
    %1030 = vmatpush1.msra.mxu0 %v990
    %1031 = vmatprep.subr.mxu0 0.0
    %1032 = vmatpush1.msra.mxu0 %v989
    %1033 = vmatprep.subr.mxu0 0.0
    %1034 = vmatpush1.msra.mxu0 %v988
    %1035 = vmatprep.subr.mxu0 0.0
    %1036 = vmatpush1.msra.mxu0 %v987
    %1037 = vmatprep.subr.mxu0 0.0
    %1038 = vmatpush2.msra.mxu0 0.0
    %1039 = vmatprep.subr.mxu0 0.0
    %1040 = vmatpush2.msra.mxu0 0.0
    %1041 = vmatprep.subr.mxu0 0.0
    %1042 = vmatpush2.msra.mxu0 0.0
    %1043 = vmatprep.subr.mxu0 0.0
    %1044 = vmatpush2.msra.mxu0 0.0
    %1045 = vmatprep.subr.mxu0 0.0
    %1046 = vmatpush2.msra.mxu0 0.0
    %1047 = vmatprep.subr.mxu0 0.0
    %1048 = vmatpush2.msra.mxu0 0.0
    %1049 = vmatprep.subr.mxu0 0.0
    %1050 = vmatpush2.msra.mxu0 0.0
    %1051 = vmatprep.subr.mxu0 0.0
    %1052 = vmatpush2.msra.mxu0 0.0
    %1053 = vmatprep.subr.mxu0 0.0
    %1054 = vmatpush2.msra.mxu0 0.0
    %1055 = vmatprep.subr.mxu0 0.0
    %1056 = vmatpush2.msra.mxu0 0.0
    %1057 = vmatprep.subr.mxu0 0.0
    %1058 = vmatpush2.msra.mxu0 0.0
    %1059 = vmatprep.subr.mxu0 0.0
    %1060 = vmatpush2.msra.mxu0 0.0
    %1061 = vmatprep.subr.mxu0 0.0
    %1062 = vmatpush2.msra.mxu0 0.0
    %1063 = vmatprep.subr.mxu0 0.0
    %1064 = vmatpush2.msra.mxu0 0.0
    %1065 = vmatprep.subr.mxu0 0.0
    %1066 = vmatpush2.msra.mxu0 0.0
    %1067 = vmatprep.subr.mxu0 0.0
    %1068 = vmatpush2.msra.mxu0 0.0
    %1069 = vmatprep.mubr.f32.mxu0 0.0
    %1070 = vmatmul.mubr.f32.gmra.mxu0 %v1003
    %v1071 = vpop.f32.mrf.mxu0
    %v1072 = vadd.f32 %v1000, %v1071
    %v1073 = vpop.f32.mrf.mxu0
    %1074 = vdwg.mxu0
    %vm1075 = vcmask 7168
    %1076 = vst.msk [vmem:[%s6] sm:$0xff] %vm1075, %v1072
    // Predicated region
    $region30: #{tpu_custom_call.1} parent=1 // pred_check
      _
    $region31: #{tpu_custom_call.1} parent=1 // pred_check_branch
      %1078 = sbr.rel (0) target = $region33
    $region32: #{tpu_custom_call.1} parent=1 // pred_region
      _
    $region33: #{tpu_custom_call.1} parent=1 // pred_fallthru
      _
    // Predicated region
    $region34: #{tpu_custom_call.1} parent=1 // pred_check
      _
    $region35: #{tpu_custom_call.1} parent=1 // pred_check_branch
      %1080 = sbr.rel (0) target = $region37
    $region36: #{tpu_custom_call.1} parent=1 // pred_region
      _
    $region37: #{tpu_custom_call.1} parent=1 // pred_fallthru
      _
    %1081 = vsyncpa [#allocation4], 1

</llo_original>
